<compile_context>
chip_gen: v7x
topology: tpu7x:2x2x1
jax: 0.10.0
libtpu: 0.0.40
codegen_flags: <defaults>
</compile_context>

<pallas_src>
import functools

import jax
import jax.numpy as jnp
from jax.experimental import pallas as pl
from jax.experimental.pallas import tpu as pltpu

EPS = 1e-8
_VMEM_LIMIT = 48 * 1024 * 1024   # explicit scoped-VMEM limit (safe on v5e/v6e/v7x)
_VMEM_BUDGET = 22 * 1024 * 1024  # target working set when picking the time tile


def _round_up(x, m):
    return (x + m - 1) // m * m


def _pick_halo_block(halo, tin):
    """Smallest multiple of 128 that divides `tin` and is >= halo (else tin)."""
    cand = 128
    while cand < tin:
        if tin % cand == 0 and cand >= halo:
            return cand
        cand += 128
    return tin


def _choose_time_tile(c, o, ksize, stride, halo, k_out, in_bytes, out_bytes):
    """Largest lane-dense (multiple-of-128) time tile whose double-buffered
    working set stays under the VMEM budget."""
    cap = max(128, _round_up(k_out, 128))
    required = 128
    while required * stride < halo:          # tile's input window must hold the halo
        required *= 2
    best = required
    for t in (128, 256, 512, 1024, 2048):
        if t < required or t > max(cap, required):
            continue
        tin = t * stride
        halo_blk = _pick_halo_block(halo, tin)
        io = 2 * (c * tin * in_bytes + c * halo_blk * in_bytes + o * t * out_bytes)
        weights = (c * ksize + o * c + 2 * o) * 4
        work = 4 * c * t * 4                 # a few live (C, T) f32 temporaries
        if io + weights + work <= _VMEM_BUDGET:
            best = t
    return best


def _depthwise_prelu(xa_ref, xb_ref, wdw_ref, alpha_ref, *,
                     ksize, stride, dilation, t_tile):
    """One (C, t_tile) tile of PReLU(depthwise_conv(x)), f32.

    xa_ref: (1, C, TIN)       main input window (TIN = t_tile * stride)
    xb_ref: (1, C, HALO_BLK)  halo window immediately following xa
    Taps are read straight from the refs (no whole-(C, Kp) materialisation).
    """
    c = xa_ref.shape[1]
    tin = xa_ref.shape[2]
    wdw = wdw_ref[...].astype(jnp.float32)               # (C, ksize)
    acc = jnp.zeros((c, t_tile), jnp.float32)
    for k in range(ksize):                                # static unroll (ksize small)
        off = k * dilation                                # static offset
        if stride == 1:
            if off == 0:
                tap = xa_ref[0]
            elif off < tin:
                tap = jnp.concatenate(
                    [xa_ref[0, :, off:], xb_ref[0, :, :off]], axis=-1)
            else:                                         # off == tin (halo == tin)
                tap = xb_ref[0, :, off - tin:off - tin + t_tile]
        else:
            # TODO(synk): stride > 1 uses strided lane reads; a wrapper-side
            # per-phase pre-decimation would make these unit-stride.
            na = 0 if off >= tin else min(t_tile, (tin - off + stride - 1) // stride)
            parts = []
            if na > 0:
                parts.append(xa_ref[0, :, pl.ds(off, na, stride=stride)])
            if na < t_tile:
                offb = off + na * stride - tin
                parts.append(xb_ref[0, :, pl.ds(offb, t_tile - na, stride=stride)])
            tap = parts[0] if len(parts) == 1 else jnp.concatenate(parts, axis=-1)
        acc = acc + wdw[:, k:k + 1] * tap.astype(jnp.float32)
    alpha = alpha_ref[0, 0]
    return jnp.where(acc > 0, acc, alpha * acc)


def _stats_kernel(xa_ref, xb_ref, wdw_ref, alpha_ref, stats_ref, *,
                  ksize, stride, dilation, t_tile, k_out):
    """Pass 1: accumulate per-batch sum and sum-of-squares of PReLU(depthwise)."""
    t = pl.program_id(1)

    @pl.when(t == 0)
    def _():
        stats_ref[...] = jnp.zeros_like(stats_ref)

    y = _depthwise_prelu(xa_ref, xb_ref, wdw_ref, alpha_ref,
                         ksize=ksize, stride=stride, dilation=dilation,
                         t_tile=t_tile)
    # Positions >= k_out are output padding; their input windows may still
    # overlap real samples, so they must be excluded from the gLN statistics.
    pos = t * t_tile + jax.lax.broadcasted_iota(jnp.int32, (1, t_tile), 1)
    ym = jnp.where(pos < k_out, y, 0.0)
    s1 = jnp.sum(ym, axis=0, keepdims=True)               # (1, T) partial sums
    s2 = jnp.sum(ym * ym, axis=0, keepdims=True)          # (1, T)
    upd = jnp.concatenate([s1, s2], axis=0).reshape(1, 2, t_tile)
    stats_ref[...] = stats_ref[...] + upd


def _apply_kernel(xa_ref, xb_ref, wdw_ref, alpha_ref, wg_ref, affine_ref, o_ref, *,
                  ksize, stride, dilation, t_tile, mxu_dtype):
    """Pass 2: depthwise+PReLU tile, then gLN folded into the pointwise matmul."""
    y = _depthwise_prelu(xa_ref, xb_ref, wdw_ref, alpha_ref,
                         ksize=ksize, stride=stride, dilation=dilation,
                         t_tile=t_tile)
    #   out = inv_std * (W ∘ gamma^T) @ y  +  (W @ beta - inv_std*mean*(W @ gamma))
    out = jnp.dot(wg_ref[...], y.astype(mxu_dtype),
                  preferred_element_type=jnp.float32)      # (O, T) on the MXU
    aff = affine_ref[0].astype(jnp.float32)                # (O, 2): [bias, scale]
    out = out * aff[:, 1:2] + aff[:, 0:1]
    o_ref[0] = out.astype(o_ref.dtype)


def depthwise_separable_conv(x, w_dw, alpha, gamma, beta, w_pw, *,
                             stride, padding, dilation, matmul_dtype=None):
    """DepthwiseSeparableConv.forward: x (M, C, K) -> (M, O, K_out).

    matmul_dtype=jnp.bfloat16 enables the fast bf16 MXU path (v6e/v7x); the
    depthwise accumulation and gLN statistics always stay in f32.
    """
    m, c, k = x.shape
    ksize = w_dw.shape[-1]
    o = w_pw.shape[0]
    k_out = (k + 2 * padding - dilation * (ksize - 1) - 1) // stride + 1
    halo = max(0, (ksize - 1) * dilation - stride + 1)

    ib = jnp.dtype(x.dtype).itemsize
    t_tile = _choose_time_tile(c, o, ksize, stride, halo, k_out, ib, ib)
    t_tiles = pl.cdiv(k_out, t_tile)
    tin = t_tile * stride
    halo_blk = _pick_halo_block(halo, tin)
    halo_ratio = tin // halo_blk

    # Padded time extent: t_tiles full input tiles + one halo block, rounded to a
    # whole number of tiles, so every (tile, tile+halo) window is in bounds.
    kp = _round_up(t_tiles * tin + halo_blk, tin)
    right_pad = kp - padding - k
    assert right_pad >= 0, "time tiling does not cover the input"
    # TODO(synk): jnp.pad costs one extra HBM round-trip of the input; a fully
    # fused variant would read the unpadded input with element-offset halo
    # windows and mask the edges in-kernel.
    xp = jnp.pad(x, ((0, 0), (0, 0), (padding, right_pad)))

    w_dw2 = w_dw.reshape(c, ksize).astype(jnp.float32)
    alpha2 = jnp.asarray(alpha, jnp.float32).reshape(1, 1)

    xa_spec = pl.BlockSpec((1, c, tin), lambda b, t: (b, 0, t))
    xb_spec = pl.BlockSpec((1, c, halo_blk),
                           lambda b, t: (b, 0, (t + 1) * halo_ratio))
    wdw_spec = pl.BlockSpec((c, ksize), lambda b, t: (0, 0))
    smem_spec = pl.BlockSpec(memory_space=pltpu.MemorySpace.SMEM)

    # ---------------- pass 1: global gLN statistics ----------------
    stats_kernel = functools.partial(
        _stats_kernel, ksize=ksize, stride=stride, dilation=dilation,
        t_tile=t_tile, k_out=k_out)
    stats = pl.pallas_call(
        stats_kernel,
        out_shape=jax.ShapeDtypeStruct((m, 2, t_tile), jnp.float32),
        grid_spec=pltpu.PrefetchScalarGridSpec(
            num_scalar_prefetch=0,
            grid=(m, t_tiles),
            in_specs=[xa_spec, xb_spec, wdw_spec, smem_spec],
            out_specs=pl.BlockSpec((1, 2, t_tile), lambda b, t: (b, 0, 0)),
        ),
        compiler_params=pltpu.CompilerParams(
            dimension_semantics=("parallel", "arbitrary"),
            vmem_limit_bytes=_VMEM_LIMIT),
    )(xp, xp, w_dw2, alpha2)

    # Tiny per-batch scalar work (plain XLA): mean / inv_std + folded-gLN terms.
    n = float(c * k_out)
    sums = jnp.sum(stats, axis=-1)                       # (M, 2)
    mean = sums[:, 0] / n
    var = jnp.maximum(sums[:, 1] / n - mean * mean, 0.0)
    inv_std = jax.lax.rsqrt(var + EPS)

    gamma_v = gamma.reshape(c).astype(jnp.float32)
    beta_v = beta.reshape(c).astype(jnp.float32)
    wpw2 = w_pw.reshape(o, c).astype(jnp.float32)
    mxu_dtype = jnp.dtype(matmul_dtype) if matmul_dtype is not None else jnp.dtype(x.dtype)
    wg = (wpw2 * gamma_v[None, :]).astype(mxu_dtype)     # (O, C), batch independent
    wbeta = wpw2 @ beta_v                                # (O,)
    wgam = wpw2 @ gamma_v                                # (O,)
    bias = wbeta[None, :] - (inv_std * mean)[:, None] * wgam[None, :]   # (M, O)
    affine = jnp.stack(
        [bias, jnp.broadcast_to(inv_std[:, None], (m, o))], axis=-1
    ).astype(jnp.float32)                                # (M, O, 2): [bias, scale]

    # ------ pass 2: depthwise+PReLU, gLN folded into the pointwise matmul ------
    apply_kernel = functools.partial(
        _apply_kernel, ksize=ksize, stride=stride, dilation=dilation,
        t_tile=t_tile, mxu_dtype=mxu_dtype)
    out = pl.pallas_call(
        apply_kernel,
        out_shape=jax.ShapeDtypeStruct((m, o, t_tiles * t_tile), x.dtype),
        grid_spec=pltpu.PrefetchScalarGridSpec(
            num_scalar_prefetch=0,
            grid=(m, t_tiles),
            in_specs=[xa_spec, xb_spec, wdw_spec, smem_spec,
                      pl.BlockSpec((o, c), lambda b, t: (0, 0)),
                      pl.BlockSpec((1, o, 2), lambda b, t: (b, 0, 0))],
            out_specs=pl.BlockSpec((1, o, t_tile), lambda b, t: (b, 0, t)),
        ),
        compiler_params=pltpu.CompilerParams(
            dimension_semantics=("parallel", "parallel"),
            vmem_limit_bytes=_VMEM_LIMIT),
    )(xp, xp, w_dw2, alpha2, wg, affine)

    return out[:, :, :k_out]


def _reference(x, w_dw, alpha, gamma, beta, w_pw, *, stride, padding, dilation):
    c = x.shape[1]
    y = jax.lax.conv_general_dilated(
        x, w_dw, window_strides=(stride,), padding=[(padding, padding)],
        rhs_dilation=(dilation,), dimension_numbers=("NCH", "OIH", "NCH"),
        feature_group_count=c)
    y = jnp.where(y > 0, y, alpha.reshape(()) * y)
    mean = jnp.mean(y, axis=(1, 2), keepdims=True)
    var = jnp.mean((y - mean) ** 2, axis=(1, 2), keepdims=True)
    z = gamma.reshape(1, -1, 1) * (y - mean) / jnp.sqrt(var + EPS) + beta.reshape(1, -1, 1)
    return jax.lax.conv_general_dilated(
        z, w_pw, window_strides=(1,), padding=[(0, 0)],
        dimension_numbers=("NCH", "OIH", "NCH"))


if __name__ == "__main__":
    # small shapes consistent with the module
    M, C_IN, C_OUT, K = 2, 4, 8, 16
    KSIZE, STRIDE, DILATION = 3, 1, 2
    PADDING = (KSIZE - 1) * DILATION // 2   # "same"-style padding -> K_out == K

    key = jax.random.PRNGKey(0)
    k1, k2, k3, k4, k5 = jax.random.split(key, 5)
    x = jax.random.normal(k1, (M, C_IN, K), dtype=jnp.float32)

    # parameter shapes from the PyTorch module; non-trivial gamma/beta so the
    # folded-gLN path is actually exercised
    w_dw = jax.random.normal(k2, (C_IN, 1, KSIZE), dtype=jnp.float32) * 0.5
    w_pw = jax.random.normal(k3, (C_OUT, C_IN, 1), dtype=jnp.float32) * 0.5
    alpha = jnp.array([0.25], dtype=jnp.float32)                       # PReLU slope
    gamma = (1.0 + 0.2 * jax.random.normal(k4, (1, C_IN, 1))).astype(jnp.float32)
    beta = (0.1 * jax.random.normal(k5, (1, C_IN, 1))).astype(jnp.float32)

    out = depthwise_separable_conv(
        x, w_dw, alpha, gamma, beta, w_pw,
        stride=STRIDE, padding=PADDING, dilation=DILATION)
    out = jax.block_until_ready(out)

    ref = _reference(x, w_dw, alpha, gamma, beta, w_pw,
                     stride=STRIDE, padding=PADDING, dilation=DILATION)
    assert out.shape == ref.shape, (out.shape, ref.shape)
    assert jnp.allclose(out, ref, atol=1e-4, rtol=1e-4), "f32 mismatch vs reference"

    # bf16-MXU fast path (v6e/v7x); depthwise accumulation + gLN stats stay f32
    out_bf16 = depthwise_separable_conv(
        x, w_dw, alpha, gamma, beta, w_pw,
        stride=STRIDE, padding=PADDING, dilation=DILATION,
        matmul_dtype=jnp.bfloat16)
    out_bf16 = jax.block_until_ready(out_bf16)
    assert jnp.allclose(out_bf16, ref, atol=5e-2, rtol=5e-2), "bf16 mismatch vs reference"

    print("KERNEL_OK")
</pallas_src>

<mosaic_0001>
module attributes {stable_mosaic.version = 11 : i64} {
  func.func @_stats_kernel(%arg0: i32, %arg1: i32, %arg2: memref<1x4x128xf32, #tpu.memory_space<vmem>>, %arg3: memref<1x4x128xf32, #tpu.memory_space<vmem>>, %arg4: memref<4x3xf32, #tpu.memory_space<vmem>>, %arg5: memref<1x1xf32, #tpu.memory_space<smem>>, %arg6: memref<1x2x128xf32, #tpu.memory_space<vmem>>) attributes {dimension_semantics = [#tpu.dimension_semantics<parallel>, #tpu.dimension_semantics<arbitrary>], iteration_bounds = array<i64: 2, 1>, scalar_prefetch = 0 : i64, scratch_operands = 0 : i64, tpu.core_type = #tpu.core_type<tc>, window_params = [{transform_indices = @transform_0, window_bounds = array<i64: 1, 4, 128>}, {transform_indices = @transform_1, window_bounds = array<i64: 1, 4, 128>}, {pipeline_mode = #tpu.pipeline_mode<synchronous>, transform_indices = @transform_2, window_bounds = array<i64: 4, 3>}, {transform_indices = @transform_3, window_bounds = array<i64: 1, 1>}, {transform_indices = @transform_4, window_bounds = array<i64: 1, 2, 128>}]} {
    %c0_i32 = arith.constant 0 : i32
    %0 = arith.cmpi eq, %arg1, %c0_i32 : i32
    %1 = arith.extui %0 : i1 to i32
    %c0_i32_0 = arith.constant 0 : i32
    %2 = arith.cmpi ne, %1, %c0_i32_0 : i32
    scf.if %2 {
      %cst_27 = arith.constant 0.000000e+00 : f32
      %55 = vector.broadcast %cst_27 : f32 to vector<1x2x128xf32>
      %c0_28 = arith.constant 0 : index
      %c0_29 = arith.constant 0 : index
      %c0_30 = arith.constant 0 : index
      %56 = vector.load %arg6[%c0_28, %c0_29, %c0_30] : memref<1x2x128xf32, #tpu.memory_space<vmem>>, vector<1x2x128xf32>
      tpu.vector_store %arg6[%c0_28, %c0_29, %c0_30], %55 {strides = array<i32>} : memref<1x2x128xf32, #tpu.memory_space<vmem>>, vector<1x2x128xf32>,
    } else {
    }
    %c0 = arith.constant 0 : index
    %c0_1 = arith.constant 0 : index
    %3 = vector.load %arg4[%c0, %c0_1] : memref<4x3xf32, #tpu.memory_space<vmem>>, vector<4x3xf32>
    %cst = arith.constant 0.000000e+00 : f32
    %4 = vector.broadcast %cst : f32 to vector<4x128xf32>
    %c0_2 = arith.constant 0 : index
    %c0_3 = arith.constant 0 : index
    %c0_4 = arith.constant 0 : index
    %5 = vector.load %arg2[%c0_2, %c0_3, %c0_4] : memref<1x4x128xf32, #tpu.memory_space<vmem>>, vector<1x4x128xf32>
    %6 = vector.shape_cast %5 : vector<1x4x128xf32> to vector<4x128xf32>
    %7 = vector.extract_strided_slice %3 {offsets = [0, 0], sizes = [4, 1], strides = [1, 1]} : vector<4x3xf32> to vector<4x1xf32>
    %8 = vector.broadcast %7 : vector<4x1xf32> to vector<4x128xf32>
    %9 = arith.mulf %8, %6 : vector<4x128xf32>
    %10 = arith.addf %4, %9 : vector<4x128xf32>
    %c0_5 = arith.constant 0 : index
    %c0_6 = arith.constant 0 : index
    %c2 = arith.constant 2 : index
    %11 = vector.load %arg2[%c0_5, %c0_6, %c2] : memref<1x4x128xf32, #tpu.memory_space<vmem>>, vector<1x4x126xf32>
    %12 = vector.shape_cast %11 : vector<1x4x126xf32> to vector<4x126xf32>
    %c0_7 = arith.constant 0 : index
    %c0_8 = arith.constant 0 : index
    %c0_9 = arith.constant 0 : index
    %13 = vector.load %arg3[%c0_7, %c0_8, %c0_9] : memref<1x4x128xf32, #tpu.memory_space<vmem>>, vector<1x4x2xf32>
    %14 = vector.shape_cast %13 : vector<1x4x2xf32> to vector<4x2xf32>
    %15 = tpu.concatenate %12, %14 in 1 : vector<4x126xf32>, vector<4x2xf32> -> vector<4x128xf32>
    %16 = vector.extract_strided_slice %3 {offsets = [0, 1], sizes = [4, 1], strides = [1, 1]} : vector<4x3xf32> to vector<4x1xf32>
    %17 = vector.broadcast %16 : vector<4x1xf32> to vector<4x128xf32>
    %18 = arith.mulf %17, %15 : vector<4x128xf32>
    %19 = arith.addf %10, %18 : vector<4x128xf32>
    %c0_10 = arith.constant 0 : index
    %c0_11 = arith.constant 0 : index
    %c4 = arith.constant 4 : index
    %20 = vector.load %arg2[%c0_10, %c0_11, %c4] : memref<1x4x128xf32, #tpu.memory_space<vmem>>, vector<1x4x124xf32>
    %21 = vector.shape_cast %20 : vector<1x4x124xf32> to vector<4x124xf32>
    %c0_12 = arith.constant 0 : index
    %c0_13 = arith.constant 0 : index
    %c0_14 = arith.constant 0 : index
    %22 = vector.load %arg3[%c0_12, %c0_13, %c0_14] : memref<1x4x128xf32, #tpu.memory_space<vmem>>, vector<1x4x4xf32>
    %23 = vector.shape_cast %22 : vector<1x4x4xf32> to vector<4x4xf32>
    %24 = tpu.concatenate %21, %23 in 1 : vector<4x124xf32>, vector<4x4xf32> -> vector<4x128xf32>
    %25 = vector.extract_strided_slice %3 {offsets = [0, 2], sizes = [4, 1], strides = [1, 1]} : vector<4x3xf32> to vector<4x1xf32>
    %26 = vector.broadcast %25 : vector<4x1xf32> to vector<4x128xf32>
    %27 = arith.mulf %26, %24 : vector<4x128xf32>
    %28 = arith.addf %19, %27 : vector<4x128xf32>
    %c0_15 = arith.constant 0 : index
    %c0_16 = arith.constant 0 : index
    %29 = memref.load %arg5[%c0_15, %c0_16] : memref<1x1xf32, #tpu.memory_space<smem>>
    %cst_17 = arith.constant 0.000000e+00 : f32
    %30 = vector.broadcast %cst_17 : f32 to vector<4x128xf32>
    %31 = arith.cmpf ogt, %28, %30 : vector<4x128xf32>
    %32 = vector.broadcast %29 : f32 to vector<4x128xf32>
    %33 = arith.mulf %32, %28 : vector<4x128xf32>
    %34 = arith.select %31, %28, %33 : vector<4x128xi1>, vector<4x128xf32>
    %c128_i32 = arith.constant 128 : i32
    %35 = arith.muli %arg1, %c128_i32 : i32
    %36 = tpu.iota {dimensions = array<i32: 1>} : vector<1x128xi32>
    %37 = vector.broadcast %35 : i32 to vector<1x128xi32>
    %38 = arith.addi %37, %36 : vector<1x128xi32>
    %c16_i32 = arith.constant 16 : i32
    %39 = vector.broadcast %c16_i32 : i32 to vector<1x128xi32>
    %40 = arith.cmpi slt, %38, %39 : vector<1x128xi32>
    %cst_18 = arith.constant 0.000000e+00 : f32
    %41 = vector.shape_cast %40 : vector<1x128xi1> to vector<1x128xi1>
    %42 = vector.broadcast %41 : vector<1x128xi1> to vector<4x128xi1>
    %43 = vector.broadcast %cst_18 : f32 to vector<4x128xf32>
    %44 = arith.select %42, %34, %43 : vector<4x128xi1>, vector<4x128xf32>
    %cst_19 = arith.constant dense<0.000000e+00> : vector<128xf32>
    %45 = vector.multi_reduction <add>, %44, %cst_19 [0] : vector<4x128xf32> to vector<128xf32>
    %46 = vector.shape_cast %45 : vector<128xf32> to vector<1x128xf32>
    %47 = arith.mulf %44, %44 : vector<4x128xf32>
    %cst_20 = arith.constant dense<0.000000e+00> : vector<128xf32>
    %48 = vector.multi_reduction <add>, %47, %cst_20 [0] : vector<4x128xf32> to vector<128xf32>
    %49 = vector.shape_cast %48 : vector<128xf32> to vector<1x128xf32>
    %50 = tpu.concatenate %46, %49 in 0 : vector<1x128xf32>, vector<1x128xf32> -> vector<2x128xf32>
    %51 = vector.shape_cast %50 : vector<2x128xf32> to vector<1x2x128xf32>
    %c0_21 = arith.constant 0 : index
    %c0_22 = arith.constant 0 : index
    %c0_23 = arith.constant 0 : index
    %52 = vector.load %arg6[%c0_21, %c0_22, %c0_23] : memref<1x2x128xf32, #tpu.memory_space<vmem>>, vector<1x2x128xf32>
    %53 = arith.addf %52, %51 : vector<1x2x128xf32>
    %c0_24 = arith.constant 0 : index
    %c0_25 = arith.constant 0 : index
    %c0_26 = arith.constant 0 : index
    %54 = vector.load %arg6[%c0_24, %c0_25, %c0_26] : memref<1x2x128xf32, #tpu.memory_space<vmem>>, vector<1x2x128xf32>
    tpu.vector_store %arg6[%c0_24, %c0_25, %c0_26], %53 {strides = array<i32>} : memref<1x2x128xf32, #tpu.memory_space<vmem>>, vector<1x2x128xf32>,
    return
  }
  func.func @transform_0(%arg0: i32, %arg1: i32) -> (i32, i32, i32) {
    %c0_i32 = arith.constant 0 : i32
    %c0_i32_0 = arith.constant 0 : i32
    return %arg0, %c0_i32, %arg1 : i32, i32, i32
  }
  func.func @transform_1(%arg0: i32, %arg1: i32) -> (i32, i32, i32) {
    %c1_i32 = arith.constant 1 : i32
    %0 = arith.addi %arg1, %c1_i32 : i32
    %c1_i32_0 = arith.constant 1 : i32
    %1 = arith.muli %0, %c1_i32_0 : i32
    %c0_i32 = arith.constant 0 : i32
    %c0_i32_1 = arith.constant 0 : i32
    return %arg0, %c0_i32, %1 : i32, i32, i32
  }
  func.func @transform_2(%arg0: i32, %arg1: i32) -> (i32, i32) {
    %c0_i32 = arith.constant 0 : i32
    %c0_i32_0 = arith.constant 0 : i32
    %c0_i32_1 = arith.constant 0 : i32
    return %c0_i32, %c0_i32_0 : i32, i32
  }
  func.func @transform_3(%arg0: i32, %arg1: i32) -> (i32, i32) {
    %c0_i32 = arith.constant 0 : i32
    %c0_i32_0 = arith.constant 0 : i32
    %c0_i32_1 = arith.constant 0 : i32
    return %c0_i32, %c0_i32_0 : i32, i32
  }
  func.func @transform_4(%arg0: i32, %arg1: i32) -> (i32, i32, i32) {
    %c0_i32 = arith.constant 0 : i32
    %c0_i32_0 = arith.constant 0 : i32
    %c0_i32_1 = arith.constant 0 : i32
    return %arg0, %c0_i32, %c0_i32_0 : i32, i32, i32
  }
}

</mosaic_0001>

<llo_original>
// kernel: tpu_custom_call.1
$region0: #{tpu_custom_call.1}
  #allocation0 [shape = 'u32[]', space=smem, size = 0x4, offset = 0x4, fixed_abs, tag = 'smem constant byte address 0x4 - core index']
  #allocation1 [shape = 'u32[144,128]{1,0:T(1,128)}', space=vmem, size = 0x12000, scoped, tag = 'internal scratch']
  #allocation2 [shape = 'f32[1,1]{1,0:T(1,128)S(6)}', space=smem, size = 0x200, scoped, tag = 'scoped memory for tpu_custom_call.1']
  %s0 = inlined_call_operand.hbm [shape: f32[2,4,256], index: 0, kind: input, shape index: {}]
  %s1 = inlined_call_operand.hbm [shape: f32[2,4,256], index: 1, kind: input, shape index: {}]
  %s2 = inlined_call_operand.vmem [shape: f32[4,3], index: 2, kind: input, shape index: {}]
  %s3 = inlined_call_operand.<no memory space> [shape: f32[1,1], index: 3, kind: input, shape index: {}]
  %s4 = inlined_call_operand.hbm [shape: f32[2,2,128], index: 4, kind: output, shape index: {}]
  %s5 = sld [smem:[#allocation0]]
  $region61: #{tpu_custom_call.1} parent=0
    _
  %s7 = ssub.s32 1, %s5
  %s8 = scalar_select 0, %s7, %s5
  %9 = sst [smem:[#allocation2]] %s3
  $region1: #{tpu_custom_call.1} parent=0
    #allocation3 [shape = 'u8[4096]{0}', space=vmem, size = 0x1000, scoped, tag = 'input window, operand 0']
    #allocation4 [shape = 's32[2]{0}', space=sflag, size = 0x8, scoped, tag = 'scoped memory for tpu_custom_call.1']
    #allocation5 [shape = 's32[2]{0}', space=sflag, size = 0x8, scoped, tag = 'scoped memory for tpu_custom_call.1']
    #allocation6 [shape = 'u8[4096]{0}', space=vmem, size = 0x1000, scoped, tag = 'input window, operand 1']
    #allocation7 [shape = 's32[2]{0}', space=sflag, size = 0x8, scoped, tag = 'scoped memory for tpu_custom_call.1']
    #allocation8 [shape = 'u8[2048]{0}', space=vmem, size = 0x800, scoped, tag = 'output window, operand 0']
    %10 = vsyncpa [#allocation4], 0
    %s11 = scalar_lea.sflag [#allocation4], 1
    %12 = vsyncpa %s11, 0
    %13 = vsyncpa [#allocation7], 0
    %s14 = scalar_lea.sflag [#allocation7], 1
    %15 = vsyncpa %s14, 0
    %16 = vsyncpa [#allocation5], 0
    %s17 = scalar_lea.sflag [#allocation5], 1
    %18 = vsyncpa %s17, 0
    loop: start=0, step=1, limit=4
    $region2: #{tpu_custom_call.1} parent=1 // loop_pre_header
      _
    $region3: #{tpu_custom_call.1} parent=1 // loop_header
      %s20 = sphi 0, %s24
      %p21 = scmp.ge.s32.totalorder %s20, 4
      %s27 = sphi 0, %s39
      %s28 = sphi 0, %s35
      %s29 = sphi 0, %s27
      %s30 = sphi 0, %s28
      %s31 = sphi 0, %s29
      %s32 = sphi 0, %s30
      %s44 = sphi 0, %s46
      %s47 = sphi 0, %s44
      %s48 = sphi 0, %s47
      %s64 = sphi 0, %s48
      %s74 = sphi 0, %s76
      %s77 = sphi 0, %s74
      %s78 = sphi 0, %s77
      %s94 = sphi 0, %s78
      %s98 = sphi 0, %s98
      %s100 = sphi 0, %s98
      %s101 = sphi 0, %s100
      %s115 = sphi 0, %s101
      %s119 = sphi 0, %s119
      %s121 = sphi 0, %s119
      %s122 = sphi 0, %s121
      %s136 = sphi 0, %s122
      %s142 = sphi 0, %s144
      %s145 = sphi 0, %s142
      %s146 = sphi 0, %s145
      %s162 = sphi 0, %s146
    $region4: #{tpu_custom_call.1} parent=1 // loop_header_branch
      %23 = sbr.rel (%p21) target = $region8
    $region5: #{tpu_custom_call.1} parent=1 // loop_body
      %s25 = ssub.s32 %s20, 1
      %s26 = ssub.s32 %s20, 2
      %s33 = sadd.s32 1, %s28
      %p34 = scmp.ge.s32.totalorder %s33, 1
      %s35 = scalar_select %p34, 0, %s33
      %s36 = sadd.s32 1, %s27
      %s37 = scalar_select %p34, %s36, %s27
      %p38 = scmp.ge.s32.totalorder %s37, 2
      %s39 = scalar_select %p38, 0, %s37
      %s40 = ssub.s32 %s27, %s39
      %s41 = ssub.s32 %s28, %s35
      %s42 = sor.u32 %s40, %s41
      %p43 = scmp.eq.s32.totalorder %s42, 0
      %s45 = sadd.s32 %s44, 1
      %s46 = scalar_select %p43, %s44, %s45
      %p49 = pneg %p43
      %p50 = scmp.eq.s32.totalorder %s20, 1
      %p51 = por %p49, %p50
      %p52 = scmp.ne.s32.totalorder %s44, %s47
      %p53 = scmp.eq.s32.totalorder %s20, 0
      %p54 = por %p52, %p53
      %p55 = scmp.ne.s32.totalorder %s44, %s47
      %p56 = scmp.eq.s32.totalorder %s25, 1
      %p57 = por %p55, %p56
      %p58 = scmp.ne.s32.totalorder %s47, %s48
      %p59 = scmp.eq.s32.totalorder %s25, 0
      %p60 = por %p58, %p59
      %p61 = scmp.ne.s32.totalorder %s47, %s48
      %p62 = scmp.eq.s32.totalorder %s26, 1
      %p63 = por %p61, %p62
      %p65 = scmp.ne.s32.totalorder %s48, %s64
      %p66 = scmp.eq.s32.totalorder %s26, 0
      %p67 = por %p65, %p66
      %s68 = sadd.s32 %s28, 1
      %s69 = sadd.s32 %s35, 1
      %s70 = ssub.s32 %s27, %s39
      %s71 = ssub.s32 %s68, %s69
      %s72 = sor.u32 %s70, %s71
      %p73 = scmp.eq.s32.totalorder %s72, 0
      %s75 = sadd.s32 %s74, 1
      %s76 = scalar_select %p73, %s74, %s75
      %p79 = pneg %p73
      %p80 = scmp.eq.s32.totalorder %s20, 1
      %p81 = por %p79, %p80
      %p82 = scmp.ne.s32.totalorder %s74, %s77
      %p83 = scmp.eq.s32.totalorder %s20, 0
      %p84 = por %p82, %p83
      %p85 = scmp.ne.s32.totalorder %s74, %s77
      %p86 = scmp.eq.s32.totalorder %s25, 1
      %p87 = por %p85, %p86
      %p88 = scmp.ne.s32.totalorder %s77, %s78
      %p89 = scmp.eq.s32.totalorder %s25, 0
      %p90 = por %p88, %p89
      %p91 = scmp.ne.s32.totalorder %s77, %s78
      %p92 = scmp.eq.s32.totalorder %s26, 1
      %p93 = por %p91, %p92
      %p95 = scmp.ne.s32.totalorder %s78, %s94
      %p96 = scmp.eq.s32.totalorder %s26, 0
      %p97 = por %p95, %p96
      %s99 = sadd.s32 %s98, 1
      %p102 = scmp.eq.s32.totalorder %s20, 1
      %p103 = scmp.ne.s32.totalorder %s98, %s100
      %p104 = scmp.eq.s32.totalorder %s20, 0
      %p105 = por %p103, %p104
      %p106 = scmp.ne.s32.totalorder %s98, %s100
      %p107 = scmp.eq.s32.totalorder %s25, 1
      %p108 = por %p106, %p107
      %p109 = scmp.ne.s32.totalorder %s100, %s101
      %p110 = scmp.eq.s32.totalorder %s25, 0
      %p111 = por %p109, %p110
      %p112 = scmp.ne.s32.totalorder %s100, %s101
      %p113 = scmp.eq.s32.totalorder %s26, 1
      %p114 = por %p112, %p113
      %p116 = scmp.ne.s32.totalorder %s101, %s115
      %p117 = scmp.eq.s32.totalorder %s26, 0
      %p118 = por %p116, %p117
      %s120 = sadd.s32 %s119, 1
      %p123 = scmp.eq.s32.totalorder %s20, 1
      %p124 = scmp.ne.s32.totalorder %s119, %s121
      %p125 = scmp.eq.s32.totalorder %s20, 0
      %p126 = por %p124, %p125
      %p127 = scmp.ne.s32.totalorder %s119, %s121
      %p128 = scmp.eq.s32.totalorder %s25, 1
      %p129 = por %p127, %p128
      %p130 = scmp.ne.s32.totalorder %s121, %s122
      %p131 = scmp.eq.s32.totalorder %s25, 0
      %p132 = por %p130, %p131
      %p133 = scmp.ne.s32.totalorder %s121, %s122
      %p134 = scmp.eq.s32.totalorder %s26, 1
      %p135 = por %p133, %p134
      %p137 = scmp.ne.s32.totalorder %s122, %s136
      %p138 = scmp.eq.s32.totalorder %s26, 0
      %p139 = por %p137, %p138
      %s140 = ssub.s32 %s27, %s39
      %p141 = scmp.eq.s32.totalorder %s140, 0
      %s143 = sadd.s32 %s142, 1
      %s144 = scalar_select %p141, %s142, %s143
      %p147 = pneg %p141
      %p148 = scmp.eq.s32.totalorder %s20, 1
      %p149 = por %p147, %p148
      %p150 = scmp.ne.s32.totalorder %s142, %s145
      %p151 = scmp.eq.s32.totalorder %s20, 0
      %p152 = por %p150, %p151
      %p153 = scmp.ne.s32.totalorder %s142, %s145
      %p154 = scmp.eq.s32.totalorder %s25, 1
      %p155 = por %p153, %p154
      %p156 = scmp.ne.s32.totalorder %s145, %s146
      %p157 = scmp.eq.s32.totalorder %s25, 0
      %p158 = por %p156, %p157
      %p159 = scmp.ne.s32.totalorder %s145, %s146
      %p160 = scmp.eq.s32.totalorder %s26, 1
      %p161 = por %p159, %p160
      %p163 = scmp.ne.s32.totalorder %s146, %s162
      %p164 = scmp.eq.s32.totalorder %s26, 0
      %p165 = por %p163, %p164
      %p166 = scmp.le.s32.totalorder 1, %s20
      %p167 = scmp.lt.s32.totalorder %s20, 3
      %p168 = pnand %p166, %p167
      %p169 = pneg %p168
      // Predicated region
      $region9: #{tpu_custom_call.1} parent=5 // pred_check
        _
      $region10: #{tpu_custom_call.1} parent=5 // pred_check_branch
        %171 = sbr.rel (%p168) target = $region12
      $region11: #{tpu_custom_call.1} parent=5 // pred_region
        %s172 = ssub.s32 %s20, 1
        // Predicated region
        $region13: #{tpu_custom_call.1} parent=11 // pred_check
          %p173 = pneg %p111
        $region14: #{tpu_custom_call.1} parent=11 // pred_check_branch
          %175 = sbr.rel (%p173) target = $region16
        $region15: #{tpu_custom_call.1} parent=11 // pred_region
          _
        $region16: #{tpu_custom_call.1} parent=11 // pred_fallthru
          _
        // Predicated region
        $region17: #{tpu_custom_call.1} parent=11 // pred_check
          %p176 = pneg %p132
        $region18: #{tpu_custom_call.1} parent=11 // pred_check_branch
          %178 = sbr.rel (%p176) target = $region20
        $region19: #{tpu_custom_call.1} parent=11 // pred_region
          _
        $region20: #{tpu_custom_call.1} parent=11 // pred_fallthru
          _
      $region12: #{tpu_custom_call.1} parent=5 // pred_fallthru
        _
      %p179 = scmp.lt.s32.totalorder %s20, 2
      // Predicated region
      $region21: #{tpu_custom_call.1} parent=5 // pred_check
        %p180 = pneg %p179
      $region22: #{tpu_custom_call.1} parent=5 // pred_check_branch
        %182 = sbr.rel (%p180) target = $region24
      $region23: #{tpu_custom_call.1} parent=5 // pred_region
        // Predicated region
        $region25: #{tpu_custom_call.1} parent=23 // pred_check
          %p183 = pneg %p54
        $region26: #{tpu_custom_call.1} parent=23 // pred_check_branch
          %185 = sbr.rel (%p183) target = $region28
        $region27: #{tpu_custom_call.1} parent=23 // pred_region
          %s186 = sand.u32 %s44, 1
          %s187 = scalar_lea.sflag [#allocation4], %s186
          %s188 = sand.u32 %s44, 1
          %s189 = smul.addr %s188, 4
          %s190 = scalar_lea.vmem [#allocation3], %s189
          %s192 = ssub.s32 64, 64
          %193 = vsyncadd %s187, %s192
          %s194 = smul.addr %s27, 2
          %s195 = sadd.s32 %s28, %s194
          %s196 = smul.addr %s195, 64
          %s197 = scalar_lea.hbm %s0, %s196
          %s199 = sshll.u32 %s190, 4
          %s200 = int_to_ptr.vmem [resolvable:$true] %s199
          %202 = dma.hbm_to_vmem [thread:$0]  %s197, 64, %s200, %s187
        $region28: #{tpu_custom_call.1} parent=23 // pred_fallthru
          _
        // Predicated region
        $region29: #{tpu_custom_call.1} parent=23 // pred_check
          %p203 = pneg %p84
        $region30: #{tpu_custom_call.1} parent=23 // pred_check_branch
          %205 = sbr.rel (%p203) target = $region32
        $region31: #{tpu_custom_call.1} parent=23 // pred_region
          %s206 = sand.u32 %s74, 1
          %s207 = scalar_lea.sflag [#allocation7], %s206
          %s208 = sand.u32 %s74, 1
          %s209 = smul.addr %s208, 4
          %s210 = scalar_lea.vmem [#allocation6], %s209
          %s211 = sadd.s32 %s28, 1
          %s213 = ssub.s32 64, 64
          %214 = vsyncadd %s207, %s213
          %s215 = smul.addr %s27, 2
          %s216 = sadd.s32 %s211, %s215
          %s217 = smul.addr %s216, 64
          %s218 = scalar_lea.hbm %s1, %s217
          %s220 = sshll.u32 %s210, 4
          %s221 = int_to_ptr.vmem [resolvable:$true] %s220
          %223 = dma.hbm_to_vmem [thread:$0]  %s218, 64, %s221, %s207
        $region32: #{tpu_custom_call.1} parent=23 // pred_fallthru
          _
      $region24: #{tpu_custom_call.1} parent=5 // pred_fallthru
        _
      %p224 = scmp.le.s32.totalorder 1, %s20
      %p225 = scmp.lt.s32.totalorder %s20, 3
      %p226 = pnand %p224, %p225
      %p227 = pneg %p226
      // Predicated region
      $region33: #{tpu_custom_call.1} parent=5 // pred_check
        _
      $region34: #{tpu_custom_call.1} parent=5 // pred_check_branch
        %229 = sbr.rel (%p226) target = $region36
      $region35: #{tpu_custom_call.1} parent=5 // pred_region
        %s230 = ssub.s32 %s20, 1
        %s231 = sand.u32 %s47, 1
        %s232 = scalar_lea.sflag [#allocation4], %s231
        %s233 = sand.u32 %s47, 1
        %s234 = smul.addr %s233, 4
        %s235 = scalar_lea.vmem [#allocation3], %s234
        // Predicated region
        $region37: #{tpu_custom_call.1} parent=35 // pred_check
          %p236 = pneg %p60
        $region38: #{tpu_custom_call.1} parent=35 // pred_check_branch
          %238 = sbr.rel (%p236) target = $region40
        $region39: #{tpu_custom_call.1} parent=35 // pred_region
          %239 = dma.done %s232, 64
        $region40: #{tpu_custom_call.1} parent=35 // pred_fallthru
          _
        %s240 = sand.u32 %s77, 1
        %s241 = scalar_lea.sflag [#allocation7], %s240
        %s242 = sand.u32 %s77, 1
        %s243 = smul.addr %s242, 4
        %s244 = scalar_lea.vmem [#allocation6], %s243
        // Predicated region
        $region41: #{tpu_custom_call.1} parent=35 // pred_check
          %p245 = pneg %p90
        $region42: #{tpu_custom_call.1} parent=35 // pred_check_branch
          %247 = sbr.rel (%p245) target = $region44
        $region43: #{tpu_custom_call.1} parent=35 // pred_region
          %248 = dma.done %s241, 64
        $region44: #{tpu_custom_call.1} parent=35 // pred_fallthru
          _
        %s249 = sand.u32 %s47, 1
        %s250 = scalar_lea.sflag [#allocation4], %s249
        %s251 = sand.u32 %s47, 1
        %s252 = smul.addr %s251, 4
        %s253 = scalar_lea.vmem [#allocation3], %s252
        %p254 = pneg %p60
        %p255 = pneg %p57
        %s256 = sand.u32 %s77, 1
        %s257 = scalar_lea.sflag [#allocation7], %s256
        %s258 = sand.u32 %s77, 1
        %s259 = smul.addr %s258, 4
        %s260 = scalar_lea.vmem [#allocation6], %s259
        %p261 = pneg %p90
        %p262 = pneg %p87
        %p263 = pneg %p111
        %p264 = pneg %p108
        %p265 = pneg %p132
        %p266 = pneg %p129
        %p267 = pneg %p158
        %p268 = pneg %p155
        %s269 = sand.u32 %s145, 1
        %s270 = scalar_lea.sflag [#allocation5], %s269
        %s271 = sand.u32 %s145, 1
        %s272 = smul.addr %s271, 2
        %s273 = scalar_lea.vmem [#allocation8], %s272
        %s274 = sadd.s32 %s30, 1
        %p275 = scmp.eq.s32.totalorder %s30, 0
        // Predicated region
        $region45: #{tpu_custom_call.1} parent=35 // pred_check
          %p276 = pneg %p275
        $region46: #{tpu_custom_call.1} parent=35 // pred_check_branch
          %278 = sbr.rel (%p276) target = $region48
        $region47: #{tpu_custom_call.1} parent=35 // pred_region
          %279 = vst [vmem:[%s273] sm:$0x3] 0.0
        $region48: #{tpu_custom_call.1} parent=35 // pred_fallthru
          _
        %v280 = vld [vmem:[%s2] sm:$0xf]
        %v281 = vld [vmem:[%s235] sm:$0xf]
        %283 = vset.pattern.permute.xlu0 0
        %284 = vperm.xlu0 %283, %v280
        %v285 = vpop.permute.xlu0 %284
        %v287 = vmul.f32 %v285, %v281
        %v288 = vadd.f32 %v287, 0.0
        %v289 = vld [vmem:[%s244] sm:$0xf]
        %291 = vrot.lane.b32.xlu0 %v281, 126
        %v292 = vpop.permute.xlu0 %291
        %295 = vrot.lane.b32.xlu0 %v289, 126
        %v296 = vpop.permute.xlu0 %295
        %vm298 = vcmask 1031168
        %v299 = vsel %vm298, %v292, %v296
        %300 = vset.pattern.permute.xlu0 1
        %301 = vperm.xlu0 %300, %v280
        %v302 = vpop.permute.xlu0 %301
        %v304 = vmul.f32 %v302, %v299
        %v305 = vadd.f32 %v288, %v304
        %306 = vrot.lane.b32.xlu0 %v281, 124
        %v307 = vpop.permute.xlu0 %306
        %309 = vrot.lane.b32.xlu0 %v289, 124
        %v310 = vpop.permute.xlu0 %309
        %vm312 = vcmask 1014784
        %v313 = vsel %vm312, %v307, %v310
        %314 = vset.pattern.permute.xlu0 2
        %315 = vperm.xlu0 %314, %v280
        %v316 = vpop.permute.xlu0 %315
        %v318 = vmul.f32 %v316, %v313
        %v319 = vadd.f32 %v305, %v318
        %s320 = sld [smem:[#allocation2]]
        %vm321 = vcmp.gt.f32.partialorder %v319, 0.0
        %v322 = vstv %s320
        %v323 = vmul.f32 %v322, %v319
        %v324 = vsel %vm321, %v319, %v323
        %s325 = smul.u32 %s30, 128
        %v326 = vlaneseq
        %v327 = vand.u32 %v326, 127
        %v328 = vstv %s325
        %v329 = vadd.s32 %v328, %v327
        %vm330 = vcmp.lt.s32.totalorder %v329, 16
        %v331 = vsel %vm330, 1, 0
        %vm332 = vcmp.eq.s32.totalorder %v331, 1
        %v333 = vsel %vm332, %v324, 0.0
        %vm334 = vcmask 1043456
        %v335 = vsel %vm334, %v333, 0.0
        %v336 = vrot.slane %v335, 4
        %v337 = vadd.f32 %v335, %v336
        %v338 = vrot.slane %v337, 2
        %v339 = vadd.f32 %v337, %v338
        %v340 = vrot.slane %v339, 1
        %v341 = vadd.f32 %v339, %v340
        %v342 = vmul.f32 %v333, %v333
        %v343 = vsel %vm334, %v342, 0.0
        %v344 = vrot.slane %v343, 4
        %v345 = vadd.f32 %v343, %v344
        %v346 = vrot.slane %v345, 2
        %v347 = vadd.f32 %v345, %v346
        %v348 = vrot.slane %v347, 1
        %v349 = vadd.f32 %v347, %v348
        %vm350 = vcmask 1040384
        %v351 = vsel %vm350, %v341, %v349
        %v352 = vld [vmem:[%s273] sm:$0x3]
        %v353 = vadd.f32 %v352, %v351
        %354 = vst [vmem:[%s273] sm:$0x3] %v353
        %s355 = sand.u32 %s145, 1
        %s356 = scalar_lea.sflag [#allocation5], %s355
        %s357 = sand.u32 %s145, 1
        %s358 = smul.addr %s357, 2
        %s359 = scalar_lea.vmem [#allocation8], %s358
        // Predicated region
        $region49: #{tpu_custom_call.1} parent=35 // pred_check
          %p360 = pneg %p155
        $region50: #{tpu_custom_call.1} parent=35 // pred_check_branch
          %362 = sbr.rel (%p360) target = $region52
        $region51: #{tpu_custom_call.1} parent=35 // pred_region
          %s364 = ssub.s32 32, 32
          %365 = vsyncadd %s356, %s364
          %s366 = smul.addr %s29, 32
          %s367 = scalar_lea.hbm %s4, %s366
          %s369 = sshll.u32 %s359, 4
          %s370 = int_to_ptr.vmem [resolvable:$true] %s369
          %372 = dma.vmem_to_hbm [thread:$0]  %s370, 32, %s367, %s356
        $region52: #{tpu_custom_call.1} parent=35 // pred_fallthru
          _
      $region36: #{tpu_custom_call.1} parent=5 // pred_fallthru
        _
      %p373 = scmp.le.s32.totalorder 2, %s20
      // Predicated region
      $region53: #{tpu_custom_call.1} parent=5 // pred_check
        %p374 = pneg %p373
      $region54: #{tpu_custom_call.1} parent=5 // pred_check_branch
        %376 = sbr.rel (%p374) target = $region56
      $region55: #{tpu_custom_call.1} parent=5 // pred_region
        %s377 = ssub.s32 %s20, 2
        // Predicated region
        $region57: #{tpu_custom_call.1} parent=55 // pred_check
          %p378 = pneg %p161
        $region58: #{tpu_custom_call.1} parent=55 // pred_check_branch
          %380 = sbr.rel (%p378) target = $region60
        $region59: #{tpu_custom_call.1} parent=55 // pred_region
          %s381 = sand.u32 %s146, 1
          %s382 = scalar_lea.sflag [#allocation5], %s381
          %s383 = sand.u32 %s146, 1
          %s384 = smul.addr %s383, 2
          %s385 = scalar_lea.vmem [#allocation8], %s384
          %386 = dma.done %s382, 32
        $region60: #{tpu_custom_call.1} parent=55 // pred_fallthru
          _
      $region56: #{tpu_custom_call.1} parent=5 // pred_fallthru
        _
    $region6: #{tpu_custom_call.1} parent=1 // loop_footer
      %s24 = sadd.s32 1, %s20
    $region7: #{tpu_custom_call.1} parent=1 // loop_footer_branch
      %19 = sbr.rel target = $region3
    $region8: #{tpu_custom_call.1} parent=1 // loop_exit
      _
    %387 = vsyncpa [#allocation4], 1
    %s388 = scalar_lea.sflag [#allocation4], 1
    %389 = vsyncpa %s388, 1
    %390 = vsyncpa [#allocation7], 1
    %s391 = scalar_lea.sflag [#allocation7], 1
    %392 = vsyncpa %s391, 1
    %393 = vsyncpa [#allocation5], 1
    %s394 = scalar_lea.sflag [#allocation5], 1
    %395 = vsyncpa %s394, 1

</llo_original>
